<compile_context>
chip_gen: v7x
topology: tpu7x:2x2x1
jax: 0.10.0
libtpu: 0.0.40
codegen_flags: <defaults>
</compile_context>

<pallas_src>
import functools
import math

import jax
import jax.numpy as jnp
from jax.experimental import pallas as pl
from jax.experimental.pallas import tpu as pltpu

INF = 10000.0

# ---- problem sizes (small, lane/sublane friendly) ----
B = 2        # batch
S = 16       # sequence length
H = 64       # hidden_size
E = 128      # intermediate_size
DK = 128     # attention_key_size


def gau_kernel(h_ref, wi_ref, p_ref, wo_ref, o_ref, *, batch, seq, e, dk):
    """Single invocation: whole batch folded into the row dimension.

    h_ref  : (B*S, H)        bf16
    wi_ref : (H, 2E+Dk)      bf16
    p_ref  : (4, Dk)         f32   rows = [q_gamma, q_beta, k_gamma, k_beta]
    wo_ref : (B*E, B*H)      bf16  block-diagonal replication of Wo
    o_ref  : (S, B*H)        f32   lane-dense output slab; out[s, b*H+h] = o[b, s, h]
    """
    # fused logit scale: (1/sqrt(Dk)) * (log(S)/log(512)), folded into q's ScaleOffset params
    c = jnp.float32(math.log(seq) / (math.log(512.0) * math.sqrt(dk)))

    # i_dense (bf16 MXU inputs, f32 accumulate) + swish, on all B*S rows at once
    x = jnp.dot(h_ref[...], wi_ref[...], preferred_element_type=jnp.float32)  # (B*S, 2E+Dk)
    act = x * jax.nn.sigmoid(x)                                               # swish / SiLU (f32)

    u = act[:, :e]                       # (B*S, E)
    v = act[:, e:2 * e]                  # (B*S, E)
    qk = act[:, 2 * e:]                  # (B*S, Dk)

    # ScaleOffset; q's gamma/beta carry the fused logit scale (applied to (1,Dk), not (S,S))
    q = qk * (p_ref[0:1, :] * c) + p_ref[1:2, :] * c
    k = qk * p_ref[2:3, :] + p_ref[3:4, :]
    q16 = q.astype(jnp.bfloat16)
    k16 = k.astype(jnp.bfloat16)

    # causal mask, computed once and reused for every batch element
    row = jax.lax.broadcasted_iota(jnp.int32, (seq, seq), 0)
    col = jax.lax.broadcasted_iota(jnp.int32, (seq, seq), 1)
    future = col > row

    gated = []
    for bi in range(batch):              # static unroll (batch is tiny)
        sl = slice(bi * seq, (bi + 1) * seq)
        # q @ k^T with swapped contracting dims -> no materialized transpose
        a = jax.lax.dot_general(q16[sl], k16[sl],
                                (((1,), (1,)), ((), ())),
                                preferred_element_type=jnp.float32)           # (S, S)
        a_max = jnp.max(a, axis=-1, keepdims=True)
        p = jnp.exp(a - a_max)
        attn = p * pl.reciprocal(jnp.sum(p, axis=-1, keepdims=True), approx=True)
        # masked_fill of the *post-softmax* weights with -INF (exact PyTorch-module behavior)
        attn = jnp.where(future, jnp.float32(-INF), attn)
        # attn @ v kept in f32 so the -1e4 fill values are carried exactly
        ctx = jnp.dot(attn, v[sl], preferred_element_type=jnp.float32)        # (S, E)
        gated.append(u[sl] * ctx)                                             # (S, E) f32

    # lane-aligned concat -> (S, B*E); one MXU matmul against block-diag Wo gives a
    # 128-lane-dense output slab -> unmasked full-width stores.
    g = jnp.concatenate(gated, axis=-1).astype(jnp.bfloat16)
    o_ref[...] = jnp.dot(g, wo_ref[...],
                         preferred_element_type=jnp.float32).astype(o_ref.dtype)


def gau_forward(h, wi, q_gamma, q_beta, k_gamma, k_beta, wo):
    b, s, hdim = h.shape
    e = wo.shape[0]
    dk = q_gamma.shape[-1]

    # Wrapper-side layout plumbing (all tiny / free):
    #   * fold batch into rows, feed the MXU bf16 operands
    #   * pack the 4 ScaleOffset vectors into one (4, Dk) block (1 DMA instead of 4)
    #   * block-diagonal Wo so the kernel emits a single (S, B*H) 128-lane-dense slab
    h2d = h.reshape(b * s, hdim).astype(jnp.bfloat16)
    wi16 = wi.astype(jnp.bfloat16)
    params = jnp.concatenate([q_gamma, q_beta, k_gamma, k_beta], axis=0)      # (4, Dk) f32
    wo_blk = jnp.kron(jnp.eye(b, dtype=wo.dtype), wo).astype(jnp.bfloat16)    # (B*E, B*H)

    flops = (2 * (b * s) * hdim * (2 * e + dk)      # i_dense
             + 2 * b * s * s * dk                   # q @ k^T
             + 2 * b * s * s * e                    # attn @ v
             + 2 * s * (b * e) * (b * hdim))        # gated output projection
    transcendentals = (b * s) * (2 * e + dk) + b * s * s + b * s
    bytes_accessed = (h2d.size * 2 + wi16.size * 2 + params.size * 4
                      + wo_blk.size * 2 + s * b * hdim * 4)

    kernel = functools.partial(gau_kernel, batch=b, seq=s, e=e, dk=dk)
    out_slab = pl.pallas_call(
        kernel,
        out_shape=jax.ShapeDtypeStruct((s, b * hdim), h.dtype),
        grid_spec=pltpu.PrefetchScalarGridSpec(
            num_scalar_prefetch=0,
            grid=(1,),
            in_specs=[
                pl.BlockSpec((b * s, hdim), lambda i: (0, 0)),          # hidden_states (folded)
                pl.BlockSpec((hdim, 2 * e + dk), lambda i: (0, 0)),     # Wi (bf16)
                pl.BlockSpec((4, dk), lambda i: (0, 0)),                # packed ScaleOffset params
                pl.BlockSpec((b * e, b * hdim), lambda i: (0, 0)),      # block-diag Wo (bf16)
            ],
            out_specs=pl.BlockSpec((s, b * hdim), lambda i: (0, 0)),
        ),
        compiler_params=pltpu.CompilerParams(dimension_semantics=("arbitrary",)),
        cost_estimate=pl.CostEstimate(flops=flops,
                                      transcendentals=transcendentals,
                                      bytes_accessed=bytes_accessed),
    )(h2d, wi16, params, wo_blk)

    # (S, B*H) slab -> (B, S, H); tiny wrapper-side layout plumbing
    return out_slab.reshape(s, b, hdim).transpose(1, 0, 2)


def gau_reference(h, wi, q_gamma, q_beta, k_gamma, k_beta, wo):
    """Pure-JAX f32 reference (mirrors the PyTorch forward exactly, eval mode)."""
    s = h.shape[-2]
    x = jnp.einsum('bsh,hd->bsd', h, wi)
    act = x * jax.nn.sigmoid(x)
    u, v, qk = act[..., :E], act[..., E:2 * E], act[..., 2 * E:]
    q = qk * q_gamma + q_beta
    k = qk * k_gamma + k_beta
    a = jnp.einsum('bmd,bnd->bmn', q, k) / math.sqrt(DK)
    a = a * (math.log(s) / math.log(512.0))
    attn = jax.nn.softmax(a, axis=-1)
    causal = jnp.triu(jnp.ones((s, s), dtype=bool), k=1)
    attn = jnp.where(causal[None], -INF, attn)
    ctx = jnp.einsum('bmn,bnd->bmd', attn, v)
    return jnp.einsum('bmd,dh->bmh', u * ctx, wo)


if __name__ == "__main__":
    key = jax.random.PRNGKey(0)
    k_h, k_wi, k_wo = jax.random.split(key, 3)

    # deterministic parameter init (matching module __init__ shapes; use_bias=False)
    hidden = jax.random.normal(k_h, (B, S, H), dtype=jnp.float32)
    wi = 0.02 * jax.random.normal(k_wi, (H, 2 * E + DK), dtype=jnp.float32)
    wo = 0.02 * jax.random.normal(k_wo, (E, H), dtype=jnp.float32)
    q_gamma = jnp.ones((1, DK), dtype=jnp.float32)   # ScaleOffset weight init = ones
    q_beta = jnp.zeros((1, DK), dtype=jnp.float32)   # ScaleOffset bias init = zeros
    k_gamma = jnp.ones((1, DK), dtype=jnp.float32)
    k_beta = jnp.zeros((1, DK), dtype=jnp.float32)

    out = gau_forward(hidden, wi, q_gamma, q_beta, k_gamma, k_beta, wo)
    out = jax.block_until_ready(out)

    ref = gau_reference(hidden, wi, q_gamma, q_beta, k_gamma, k_beta, wo)
    rel_err = float(jnp.max(jnp.abs(out - ref)) / (jnp.max(jnp.abs(ref)) + 1e-6))
    assert rel_err < 1e-2, f"mismatch vs f32 reference: rel_err={rel_err}"

    print("KERNEL_OK")
</pallas_src>

<mosaic_0001>
module attributes {stable_mosaic.version = 11 : i64} {
  func.func @gau_kernel(%arg0: i32, %arg1: memref<32x64xbf16, #tpu.memory_space<vmem>>, %arg2: memref<64x384xbf16, #tpu.memory_space<vmem>>, %arg3: memref<4x128xf32, #tpu.memory_space<vmem>>, %arg4: memref<256x128xbf16, #tpu.memory_space<vmem>>, %arg5: memref<16x128xf32, #tpu.memory_space<vmem>>) attributes {dimension_semantics = [#tpu.dimension_semantics<arbitrary>], iteration_bounds = array<i64: 1>, scalar_prefetch = 0 : i64, scratch_operands = 0 : i64, tpu.core_type = #tpu.core_type<tc>, window_params = [{pipeline_mode = #tpu.pipeline_mode<synchronous>, transform_indices = @transform_0, window_bounds = array<i64: 32, 64>}, {pipeline_mode = #tpu.pipeline_mode<synchronous>, transform_indices = @transform_1, window_bounds = array<i64: 64, 384>}, {pipeline_mode = #tpu.pipeline_mode<synchronous>, transform_indices = @transform_2, window_bounds = array<i64: 4, 128>}, {pipeline_mode = #tpu.pipeline_mode<synchronous>, transform_indices = @transform_3, window_bounds = array<i64: 256, 128>}, {pipeline_mode = #tpu.pipeline_mode<synchronous>, transform_indices = @transform_4, window_bounds = array<i64: 16, 128>}]} {
    %c0 = arith.constant 0 : index
    %c0_0 = arith.constant 0 : index
    %0 = vector.load %arg1[%c0, %c0_0] : memref<32x64xbf16, #tpu.memory_space<vmem>>, vector<32x64xbf16>
    %c0_1 = arith.constant 0 : index
    %c0_2 = arith.constant 0 : index
    %1 = vector.load %arg2[%c0_1, %c0_2] : memref<64x384xbf16, #tpu.memory_space<vmem>>, vector<64x384xbf16>
    %cst = arith.constant dense<0.000000e+00> : vector<32x384xf32>
    %2 = tpu.matmul %0, %1, %cst {dimension_numbers = #tpu.dot_dimension_numbers<[1], [0], [0], [1], [0, 0, 1, 1], [], []>} : vector<32x64xbf16>, vector<64x384xbf16>, vector<32x384xf32> -> vector<32x384xf32>
    %3 = arith.negf %2 : vector<32x384xf32>
    %4 = math.exp %3 : vector<32x384xf32>
    %cst_3 = arith.constant 1.000000e+00 : f32
    %5 = vector.broadcast %cst_3 : f32 to vector<32x384xf32>
    %6 = arith.addf %5, %4 : vector<32x384xf32>
    %7 = arith.divf %5, %6 : vector<32x384xf32>
    %8 = arith.mulf %2, %7 : vector<32x384xf32>
    %9 = vector.extract_strided_slice %8 {offsets = [0, 0], sizes = [32, 128], strides = [1, 1]} : vector<32x384xf32> to vector<32x128xf32>
    %10 = vector.extract_strided_slice %8 {offsets = [0, 128], sizes = [32, 128], strides = [1, 1]} : vector<32x384xf32> to vector<32x128xf32>
    %11 = vector.extract_strided_slice %8 {offsets = [0, 256], sizes = [32, 128], strides = [1, 1]} : vector<32x384xf32> to vector<32x128xf32>
    %c0_4 = arith.constant 0 : index
    %c0_5 = arith.constant 0 : index
    %12 = vector.load %arg3[%c0_4, %c0_5] : memref<4x128xf32, #tpu.memory_space<vmem>>, vector<1x128xf32>
    %cst_6 = arith.constant 0.0392837115 : f32
    %13 = vector.broadcast %cst_6 : f32 to vector<1x128xf32>
    %14 = arith.mulf %12, %13 : vector<1x128xf32>
    %15 = vector.broadcast %14 : vector<1x128xf32> to vector<32x128xf32>
    %16 = arith.mulf %11, %15 : vector<32x128xf32>
    %c1 = arith.constant 1 : index
    %c0_7 = arith.constant 0 : index
    %17 = vector.load %arg3[%c1, %c0_7] : memref<4x128xf32, #tpu.memory_space<vmem>>, vector<1x128xf32>
    %cst_8 = arith.constant 0.0392837115 : f32
    %18 = vector.broadcast %cst_8 : f32 to vector<1x128xf32>
    %19 = arith.mulf %17, %18 : vector<1x128xf32>
    %20 = vector.broadcast %19 : vector<1x128xf32> to vector<32x128xf32>
    %21 = arith.addf %16, %20 : vector<32x128xf32>
    %c2 = arith.constant 2 : index
    %c0_9 = arith.constant 0 : index
    %22 = vector.load %arg3[%c2, %c0_9] : memref<4x128xf32, #tpu.memory_space<vmem>>, vector<1x128xf32>
    %23 = vector.broadcast %22 : vector<1x128xf32> to vector<32x128xf32>
    %24 = arith.mulf %11, %23 : vector<32x128xf32>
    %c3 = arith.constant 3 : index
    %c0_10 = arith.constant 0 : index
    %25 = vector.load %arg3[%c3, %c0_10] : memref<4x128xf32, #tpu.memory_space<vmem>>, vector<1x128xf32>
    %26 = vector.broadcast %25 : vector<1x128xf32> to vector<32x128xf32>
    %27 = arith.addf %24, %26 : vector<32x128xf32>
    %28 = arith.truncf %21 : vector<32x128xf32> to vector<32x128xbf16>
    %29 = arith.truncf %27 : vector<32x128xf32> to vector<32x128xbf16>
    %30 = tpu.iota {dimensions = array<i32: 0>} : vector<16x16xi32>
    %31 = tpu.iota {dimensions = array<i32: 1>} : vector<16x16xi32>
    %32 = arith.cmpi sgt, %31, %30 : vector<16x16xi32>
    %33 = vector.extract_strided_slice %28 {offsets = [0, 0], sizes = [16, 128], strides = [1, 1]} : vector<32x128xbf16> to vector<16x128xbf16>
    %34 = vector.extract_strided_slice %29 {offsets = [0, 0], sizes = [16, 128], strides = [1, 1]} : vector<32x128xbf16> to vector<16x128xbf16>
    %cst_11 = arith.constant dense<0.000000e+00> : vector<16x16xf32>
    %35 = tpu.matmul %33, %34, %cst_11 {dimension_numbers = #tpu.dot_dimension_numbers<[1], [1], [0], [0], [0, 0, 1, 0], [], []>} : vector<16x128xbf16>, vector<16x128xbf16>, vector<16x16xf32> -> vector<16x16xf32>
    %cst_12 = arith.constant dense<0xFF800000> : vector<16xf32>
    %36 = vector.multi_reduction <maximumf>, %35, %cst_12 [1] : vector<16x16xf32> to vector<16xf32>
    %37 = vector.shape_cast %36 : vector<16xf32> to vector<16x1xf32>
    %38 = vector.broadcast %37 : vector<16x1xf32> to vector<16x16xf32>
    %39 = arith.subf %35, %38 : vector<16x16xf32>
    %40 = math.exp %39 : vector<16x16xf32>
    %cst_13 = arith.constant dense<0.000000e+00> : vector<16xf32>
    %41 = vector.multi_reduction <add>, %40, %cst_13 [1] : vector<16x16xf32> to vector<16xf32>
    %42 = vector.shape_cast %41 : vector<16xf32> to vector<16x1xf32>
    %43 = tpu.reciprocal %42 {approx = true} : vector<16x1xf32> -> vector<16x1xf32>
    %44 = vector.broadcast %43 : vector<16x1xf32> to vector<16x16xf32>
    %45 = arith.mulf %40, %44 : vector<16x16xf32>
    %cst_14 = arith.constant -1.000000e+04 : f32
    %46 = vector.broadcast %cst_14 : f32 to vector<16x16xf32>
    %47 = arith.select %32, %46, %45 : vector<16x16xi1>, vector<16x16xf32>
    %48 = vector.extract_strided_slice %10 {offsets = [0, 0], sizes = [16, 128], strides = [1, 1]} : vector<32x128xf32> to vector<16x128xf32>
    %cst_15 = arith.constant dense<0.000000e+00> : vector<16x128xf32>
    %49 = tpu.matmul %47, %48, %cst_15 {dimension_numbers = #tpu.dot_dimension_numbers<[1], [0], [0], [1], [0, 0, 1, 1], [], []>} : vector<16x16xf32>, vector<16x128xf32>, vector<16x128xf32> -> vector<16x128xf32>
    %50 = vector.extract_strided_slice %9 {offsets = [0, 0], sizes = [16, 128], strides = [1, 1]} : vector<32x128xf32> to vector<16x128xf32>
    %51 = arith.mulf %50, %49 : vector<16x128xf32>
    %52 = vector.extract_strided_slice %28 {offsets = [16, 0], sizes = [16, 128], strides = [1, 1]} : vector<32x128xbf16> to vector<16x128xbf16>
    %53 = vector.extract_strided_slice %29 {offsets = [16, 0], sizes = [16, 128], strides = [1, 1]} : vector<32x128xbf16> to vector<16x128xbf16>
    %cst_16 = arith.constant dense<0.000000e+00> : vector<16x16xf32>
    %54 = tpu.matmul %52, %53, %cst_16 {dimension_numbers = #tpu.dot_dimension_numbers<[1], [1], [0], [0], [0, 0, 1, 0], [], []>} : vector<16x128xbf16>, vector<16x128xbf16>, vector<16x16xf32> -> vector<16x16xf32>
    %cst_17 = arith.constant dense<0xFF800000> : vector<16xf32>
    %55 = vector.multi_reduction <maximumf>, %54, %cst_17 [1] : vector<16x16xf32> to vector<16xf32>
    %56 = vector.shape_cast %55 : vector<16xf32> to vector<16x1xf32>
    %57 = vector.broadcast %56 : vector<16x1xf32> to vector<16x16xf32>
    %58 = arith.subf %54, %57 : vector<16x16xf32>
    %59 = math.exp %58 : vector<16x16xf32>
    %cst_18 = arith.constant dense<0.000000e+00> : vector<16xf32>
    %60 = vector.multi_reduction <add>, %59, %cst_18 [1] : vector<16x16xf32> to vector<16xf32>
    %61 = vector.shape_cast %60 : vector<16xf32> to vector<16x1xf32>
    %62 = tpu.reciprocal %61 {approx = true} : vector<16x1xf32> -> vector<16x1xf32>
    %63 = vector.broadcast %62 : vector<16x1xf32> to vector<16x16xf32>
    %64 = arith.mulf %59, %63 : vector<16x16xf32>
    %cst_19 = arith.constant -1.000000e+04 : f32
    %65 = vector.broadcast %cst_19 : f32 to vector<16x16xf32>
    %66 = arith.select %32, %65, %64 : vector<16x16xi1>, vector<16x16xf32>
    %67 = vector.extract_strided_slice %10 {offsets = [16, 0], sizes = [16, 128], strides = [1, 1]} : vector<32x128xf32> to vector<16x128xf32>
    %cst_20 = arith.constant dense<0.000000e+00> : vector<16x128xf32>
    %68 = tpu.matmul %66, %67, %cst_20 {dimension_numbers = #tpu.dot_dimension_numbers<[1], [0], [0], [1], [0, 0, 1, 1], [], []>} : vector<16x16xf32>, vector<16x128xf32>, vector<16x128xf32> -> vector<16x128xf32>
    %69 = vector.extract_strided_slice %9 {offsets = [16, 0], sizes = [16, 128], strides = [1, 1]} : vector<32x128xf32> to vector<16x128xf32>
    %70 = arith.mulf %69, %68 : vector<16x128xf32>
    %71 = tpu.concatenate %51, %70 in 1 : vector<16x128xf32>, vector<16x128xf32> -> vector<16x256xf32>
    %72 = arith.truncf %71 : vector<16x256xf32> to vector<16x256xbf16>
    %c0_21 = arith.constant 0 : index
    %c0_22 = arith.constant 0 : index
    %73 = vector.load %arg4[%c0_21, %c0_22] : memref<256x128xbf16, #tpu.memory_space<vmem>>, vector<256x128xbf16>
    %cst_23 = arith.constant dense<0.000000e+00> : vector<16x128xf32>
    %74 = tpu.matmul %72, %73, %cst_23 {dimension_numbers = #tpu.dot_dimension_numbers<[1], [0], [0], [1], [0, 0, 1, 1], [], []>} : vector<16x256xbf16>, vector<256x128xbf16>, vector<16x128xf32> -> vector<16x128xf32>
    %c0_24 = arith.constant 0 : index
    %c0_25 = arith.constant 0 : index
    %75 = vector.load %arg5[%c0_24, %c0_25] : memref<16x128xf32, #tpu.memory_space<vmem>>, vector<16x128xf32>
    tpu.vector_store %arg5[%c0_24, %c0_25], %74 {strides = array<i32>} : memref<16x128xf32, #tpu.memory_space<vmem>>, vector<16x128xf32>,
    return
  }
  func.func @transform_0(%arg0: i32) -> (i32, i32) {
    %c0_i32 = arith.constant 0 : i32
    %c0_i32_0 = arith.constant 0 : i32
    %c0_i32_1 = arith.constant 0 : i32
    return %c0_i32, %c0_i32_0 : i32, i32
  }
  func.func @transform_1(%arg0: i32) -> (i32, i32) {
    %c0_i32 = arith.constant 0 : i32
    %c0_i32_0 = arith.constant 0 : i32
    %c0_i32_1 = arith.constant 0 : i32
    return %c0_i32, %c0_i32_0 : i32, i32
  }
  func.func @transform_2(%arg0: i32) -> (i32, i32) {
    %c0_i32 = arith.constant 0 : i32
    %c0_i32_0 = arith.constant 0 : i32
    %c0_i32_1 = arith.constant 0 : i32
    return %c0_i32, %c0_i32_0 : i32, i32
  }
  func.func @transform_3(%arg0: i32) -> (i32, i32) {
    %c0_i32 = arith.constant 0 : i32
    %c0_i32_0 = arith.constant 0 : i32
    %c0_i32_1 = arith.constant 0 : i32
    return %c0_i32, %c0_i32_0 : i32, i32
  }
  func.func @transform_4(%arg0: i32) -> (i32, i32) {
    %c0_i32 = arith.constant 0 : i32
    %c0_i32_0 = arith.constant 0 : i32
    %c0_i32_1 = arith.constant 0 : i32
    return %c0_i32, %c0_i32_0 : i32, i32
  }
}

</mosaic_0001>

<llo_original>
// kernel: tpu_custom_call.1
$region0: #{tpu_custom_call.1}
  #allocation0 [shape = 'u32[]', space=smem, size = 0x4, offset = 0x4, fixed_abs, tag = 'smem constant byte address 0x4 - core index']
  #allocation1 [shape = 'u32[144,128]{1,0:T(1,128)}', space=vmem, size = 0x12000, scoped, tag = 'internal scratch']
  %s0 = inlined_call_operand.hbm [shape: bf16[32,64], index: 0, kind: input, shape index: {}]
  %s1 = inlined_call_operand.hbm [shape: bf16[64,384], index: 1, kind: input, shape index: {}]
  %s2 = inlined_call_operand.vmem [shape: f32[4,128], index: 2, kind: input, shape index: {}]
  %s3 = inlined_call_operand.hbm [shape: bf16[256,128], index: 3, kind: input, shape index: {}]
  %s4 = inlined_call_operand.hbm [shape: f32[16,128], index: 4, kind: output, shape index: {}]
  %s5 = sld [smem:[#allocation0]]
  $region38: #{tpu_custom_call.1} parent=0
    _
  %s7 = ssub.s32 1, %s5
  %s8 = scalar_select 0, %s7, %s5
  $region1: #{tpu_custom_call.1} parent=0
    #allocation2 [shape = 'u8[8192]{0}', space=vmem, size = 0x2000, scoped, tag = 'input window, operand 0, single buffered']
    #allocation3 [shape = 's32[1]{0}', space=sflag, size = 0x4, scoped, tag = 'scoped memory for tpu_custom_call.1']
    #allocation4 [shape = 's32[1]{0}', space=sflag, size = 0x4, scoped, tag = 'scoped memory for tpu_custom_call.1']
    #allocation5 [shape = 'u8[49152]{0}', space=vmem, size = 0xc000, scoped, tag = 'input window, operand 1, single buffered']
    #allocation6 [shape = 's32[1]{0}', space=sflag, size = 0x4, scoped, tag = 'scoped memory for tpu_custom_call.1']
    #allocation7 [shape = 'u8[65536]{0}', space=vmem, size = 0x10000, scoped, tag = 'input window, operand 3, single buffered']
    #allocation8 [shape = 'u8[8192]{0}', space=vmem, size = 0x2000, scoped, tag = 'output window, operand 0, single buffered']
    %9 = vsyncpa [#allocation3], 0
    %10 = vsyncpa [#allocation6], 0
    %11 = vsyncpa [#allocation4], 0
    // Predicated region
    $region2: #{tpu_custom_call.1} parent=1 // pred_check
      _
    $region3: #{tpu_custom_call.1} parent=1 // pred_check_branch
      %13 = sbr.rel (0) target = $region5
    $region4: #{tpu_custom_call.1} parent=1 // pred_region
      %s15 = ssub.s32 256, 256
      %16 = vsyncadd [#allocation3], %s15
      %s17 = sshll.u32 [#allocation2], 4
      %s18 = int_to_ptr.vmem [resolvable:$true] %s17
      %23 = dma.hbm_to_vmem [thread:$0]  %s0, 256, %s18, [#allocation3], 64, 64, 4
    $region5: #{tpu_custom_call.1} parent=1 // pred_fallthru
      _
    // Predicated region
    $region6: #{tpu_custom_call.1} parent=1 // pred_check
      _
    $region7: #{tpu_custom_call.1} parent=1 // pred_check_branch
      %25 = sbr.rel (0) target = $region9
    $region8: #{tpu_custom_call.1} parent=1 // pred_region
      %s27 = ssub.s32 1536, 1536
      %28 = vsyncadd [#allocation6], %s27
      %s29 = sshll.u32 [#allocation5], 4
      %s30 = int_to_ptr.vmem [resolvable:$true] %s29
      %35 = dma.hbm_to_vmem [thread:$0]  %s1, 1536, %s30, [#allocation6], 192, 192, 12
    $region9: #{tpu_custom_call.1} parent=1 // pred_fallthru
      _
    // Predicated region
    $region10: #{tpu_custom_call.1} parent=1 // pred_check
      _
    $region11: #{tpu_custom_call.1} parent=1 // pred_check_branch
      %37 = sbr.rel (0) target = $region13
    $region12: #{tpu_custom_call.1} parent=1 // pred_region
      _
    $region13: #{tpu_custom_call.1} parent=1 // pred_fallthru
      _
    // Predicated region
    $region14: #{tpu_custom_call.1} parent=1 // pred_check
      _
    $region15: #{tpu_custom_call.1} parent=1 // pred_check_branch
      %39 = sbr.rel (0) target = $region17
    $region16: #{tpu_custom_call.1} parent=1 // pred_region
      %s41 = ssub.s32 2048, 2048
      %42 = vsyncadd [#allocation6], %s41
      %s43 = sshll.u32 [#allocation7], 4
      %s44 = int_to_ptr.vmem [resolvable:$true] %s43
      %49 = dma.hbm_to_vmem [thread:$0]  %s3, 2048, %s44, [#allocation6], 64, 64, 4
    $region17: #{tpu_custom_call.1} parent=1 // pred_fallthru
      _
    // Predicated region
    $region18: #{tpu_custom_call.1} parent=1 // pred_check
      _
    $region19: #{tpu_custom_call.1} parent=1 // pred_check_branch
      %51 = sbr.rel (0) target = $region21
    $region20: #{tpu_custom_call.1} parent=1 // pred_region
      %52 = dma.done [#allocation3], 256
    $region21: #{tpu_custom_call.1} parent=1 // pred_fallthru
      _
    // Predicated region
    $region22: #{tpu_custom_call.1} parent=1 // pred_check
      _
    $region23: #{tpu_custom_call.1} parent=1 // pred_check_branch
      %54 = sbr.rel (0) target = $region25
    $region24: #{tpu_custom_call.1} parent=1 // pred_region
      %55 = dma.done [#allocation6], 1536
    $region25: #{tpu_custom_call.1} parent=1 // pred_fallthru
      _
    // Predicated region
    $region26: #{tpu_custom_call.1} parent=1 // pred_check
      _
    $region27: #{tpu_custom_call.1} parent=1 // pred_check_branch
      %57 = sbr.rel (0) target = $region29
    $region28: #{tpu_custom_call.1} parent=1 // pred_region
      %58 = dma.done [#allocation6], 2048
    $region29: #{tpu_custom_call.1} parent=1 // pred_fallthru
      _
    %v60 = vld [vmem:[#allocation2] sm:$0xf]
    %v61 = vld [vmem:[#allocation2 + $0x4] sm:$0xf]
    %v62 = vld [vmem:[#allocation2 + $0x8] sm:$0xf]
    %v63 = vld [vmem:[#allocation2 + $0xc] sm:$0xf]
    %v64 = vld [vmem:[#allocation5] sm:$0xff]
    %v65 = vld [vmem:[#allocation5 + $0x8] sm:$0xf]
    %v66 = vld [vmem:[#allocation5 + $0xc] sm:$0xff]
    %v67 = vld [vmem:[#allocation5 + $0x14] sm:$0xf]
    %v68 = vld [vmem:[#allocation5 + $0x18] sm:$0xff]
    %v69 = vld [vmem:[#allocation5 + $0x20] sm:$0xf]
    %v70 = vld [vmem:[#allocation5 + $0x24] sm:$0xff]
    %v71 = vld [vmem:[#allocation5 + $0x2c] sm:$0xf]
    %v72 = vld [vmem:[#allocation5 + $0x30] sm:$0xff]
    %v73 = vld [vmem:[#allocation5 + $0x38] sm:$0xf]
    %v74 = vld [vmem:[#allocation5 + $0x3c] sm:$0xff]
    %v75 = vld [vmem:[#allocation5 + $0x44] sm:$0xf]
    %v76 = vld [vmem:[#allocation5 + $0x48] sm:$0xff]
    %v77 = vld [vmem:[#allocation5 + $0x50] sm:$0xf]
    %v78 = vld [vmem:[#allocation5 + $0x54] sm:$0xff]
    %v79 = vld [vmem:[#allocation5 + $0x5c] sm:$0xf]
    %v84 = vunpack.c.l.b16 %v60
    %v85 = vunpack.c.l.b16 %v61
    %v86 = vunpack.c.l.b16 %v62
    %v87 = vunpack.c.l.b16 %v63
    %v88 = vpack.c.b16 %v85, %v84
    %v89 = vpack.c.b16 %v87, %v86
    %v106 = vunpack.c.l.b16 %v64
    %v107 = vunpack.c.h.b16 %v64
    %v108 = vunpack.c.l.b16 %v65
    %v109 = vunpack.c.l.b16 %v66
    %v110 = vunpack.c.h.b16 %v66
    %v111 = vunpack.c.l.b16 %v67
    %v112 = vunpack.c.l.b16 %v68
    %v113 = vunpack.c.h.b16 %v68
    %v114 = vunpack.c.l.b16 %v69
    %v115 = vunpack.c.l.b16 %v70
    %v116 = vunpack.c.h.b16 %v70
    %v117 = vunpack.c.l.b16 %v71
    %v118 = vunpack.c.l.b16 %v72
    %v119 = vunpack.c.h.b16 %v72
    %v120 = vunpack.c.l.b16 %v73
    %v121 = vunpack.c.l.b16 %v74
    %v122 = vunpack.c.h.b16 %v74
    %v123 = vunpack.c.l.b16 %v75
    %v124 = vunpack.c.l.b16 %v76
    %v125 = vunpack.c.h.b16 %v76
    %v126 = vunpack.c.l.b16 %v77
    %v127 = vunpack.c.l.b16 %v78
    %v128 = vunpack.c.h.b16 %v78
    %v129 = vunpack.c.l.b16 %v79
    %v130 = vpack.c.b16 %v109, %v106
    %v131 = vpack.c.b16 %v110, %v107
    %v132 = vpack.c.b16 %v111, %v108
    %v133 = vpack.c.b16 %v115, %v112
    %v134 = vpack.c.b16 %v116, %v113
    %v135 = vpack.c.b16 %v117, %v114
    %v136 = vpack.c.b16 %v121, %v118
    %v137 = vpack.c.b16 %v122, %v119
    %v138 = vpack.c.b16 %v123, %v120
    %v139 = vpack.c.b16 %v127, %v124
    %v140 = vpack.c.b16 %v128, %v125
    %v141 = vpack.c.b16 %v129, %v126
    %vm154 = vcmask 523264
    %v156 = vsel %vm154, %v88, 0
    %v159 = vsel %vm154, %v89, 0
    %161 = vmatprep.subr.bf16.mxu0 %v131
    %162 = vmatpush1.bf16.msra.mxu0 %v130
    %163 = vmatprep.subr.bf16.mxu0 %v134
    %164 = vmatpush1.bf16.msra.mxu0 %v133
    %165 = vmatprep.subr.bf16.mxu0 %v137
    %166 = vmatpush1.bf16.msra.mxu0 %v136
    %167 = vmatprep.subr.bf16.mxu0 %v140
    %168 = vmatpush1.bf16.msra.mxu0 %v139
    %169 = vmatprep.subr.bf16.mxu0 0
    %170 = vmatpush1.bf16.msra.mxu0 0
    %171 = vmatprep.subr.bf16.mxu0 0
    %172 = vmatpush1.bf16.msra.mxu0 0
    %173 = vmatprep.subr.bf16.mxu0 0
    %174 = vmatpush1.bf16.msra.mxu0 0
    %175 = vmatprep.subr.bf16.mxu0 0
    %176 = vmatpush1.bf16.msra.mxu0 0
    %177 = vmatprep.subr.bf16.mxu0 0
    %178 = vmatpush1.bf16.msra.mxu0 0
    %179 = vmatprep.subr.bf16.mxu0 0
    %180 = vmatpush1.bf16.msra.mxu0 0
    %181 = vmatprep.subr.bf16.mxu0 0
    %182 = vmatpush1.bf16.msra.mxu0 0
    %183 = vmatprep.subr.bf16.mxu0 0
    %184 = vmatpush1.bf16.msra.mxu0 0
    %185 = vmatprep.subr.bf16.mxu0 0
    %186 = vmatpush1.bf16.msra.mxu0 0
    %187 = vmatprep.subr.bf16.mxu0 0
    %188 = vmatpush1.bf16.msra.mxu0 0
    %189 = vmatprep.subr.bf16.mxu0 0
    %190 = vmatpush1.bf16.msra.mxu0 0
    %191 = vmatprep.subr.bf16.mxu0 0
    %192 = vmatpush1.bf16.msra.mxu0 0
    %193 = vmatprep.mubr.bf16.mxu0 0
    %194 = vmatmul.mubr.bf16.gmra.mrb[0].mxu0 %v156
    %v195 = vpop.f32.mrb[0].mxu0
    %v196 = vadd.f32 0.0, %v195
    %v197 = vpop.f32.mrb[0].mxu0
    %v198 = vadd.f32 0.0, %v197
    %v199 = vpop.f32.mrb[0].mxu0
    %v200 = vadd.f32 0.0, %v199
    %v201 = vpop.f32.mrb[0].mxu0
    %v202 = vadd.f32 0.0, %v201
    %203 = vmatprep.mubr.bf16.mxu0 0
    %204 = vmatmul.mubr.bf16.gmra.mrb[0].mxu0 %v159
    %v205 = vpop.f32.mrb[0].mxu0
    %v206 = vadd.f32 0.0, %v205
    %v207 = vpop.f32.mrb[0].mxu0
    %v208 = vadd.f32 0.0, %v207
    %v209 = vpop.f32.mrb[0].mxu0
    %v210 = vadd.f32 0.0, %v209
    %v211 = vpop.f32.mrb[0].mxu0
    %v212 = vadd.f32 0.0, %v211
    %213 = vdwg.mxu0
    %214 = vmatprep.subr.bf16.mxu0 0
    %215 = vmatpush1.bf16.msra.mxu0 %v132
    %216 = vmatprep.subr.bf16.mxu0 0
    %217 = vmatpush1.bf16.msra.mxu0 %v135
    %218 = vmatprep.subr.bf16.mxu0 0
    %219 = vmatpush1.bf16.msra.mxu0 %v138
    %220 = vmatprep.subr.bf16.mxu0 0
    %221 = vmatpush1.bf16.msra.mxu0 %v141
    %222 = vmatprep.subr.bf16.mxu0 0
    %223 = vmatpush1.bf16.msra.mxu0 0
    %224 = vmatprep.subr.bf16.mxu0 0
    %225 = vmatpush1.bf16.msra.mxu0 0
    %226 = vmatprep.subr.bf16.mxu0 0
    %227 = vmatpush1.bf16.msra.mxu0 0
    %228 = vmatprep.subr.bf16.mxu0 0
    %229 = vmatpush1.bf16.msra.mxu0 0
    %230 = vmatprep.subr.bf16.mxu0 0
    %231 = vmatpush1.bf16.msra.mxu0 0
    %232 = vmatprep.subr.bf16.mxu0 0
    %233 = vmatpush1.bf16.msra.mxu0 0
    %234 = vmatprep.subr.bf16.mxu0 0
    %235 = vmatpush1.bf16.msra.mxu0 0
    %236 = vmatprep.subr.bf16.mxu0 0
    %237 = vmatpush1.bf16.msra.mxu0 0
    %238 = vmatprep.subr.bf16.mxu0 0
    %239 = vmatpush1.bf16.msra.mxu0 0
    %240 = vmatprep.subr.bf16.mxu0 0
    %241 = vmatpush1.bf16.msra.mxu0 0
    %242 = vmatprep.subr.bf16.mxu0 0
    %243 = vmatpush1.bf16.msra.mxu0 0
    %244 = vmatprep.subr.bf16.mxu0 0
    %245 = vmatpush1.bf16.msra.mxu0 0
    %246 = vmatprep.mubr.bf16.mxu0 0
    %247 = vmatmul.mubr.bf16.gmra.mrb[0].mxu0 %v156
    %v248 = vpop.f32.mrb[0].mxu0
    %v249 = vadd.f32 0.0, %v248
    %v250 = vpop.f32.mrb[0].mxu0
    %v251 = vpop.f32.mrb[0].mxu0
    %v252 = vadd.f32 0.0, %v251
    %v253 = vpop.f32.mrb[0].mxu0
    %254 = vmatprep.mubr.bf16.mxu0 0
    %255 = vmatmul.mubr.bf16.gmra.mrb[0].mxu0 %v159
    %v256 = vpop.f32.mrb[0].mxu0
    %v257 = vadd.f32 0.0, %v256
    %v258 = vpop.f32.mrb[0].mxu0
    %v259 = vpop.f32.mrb[0].mxu0
    %v260 = vadd.f32 0.0, %v259
    %v261 = vpop.f32.mrb[0].mxu0
    %262 = vdwg.mxu0
    %v263 = vxor.u32 %v196, 2147483648
    %v264 = vxor.u32 %v198, 2147483648
    %v265 = vxor.u32 %v249, 2147483648
    %v266 = vxor.u32 %v200, 2147483648
    %v267 = vxor.u32 %v202, 2147483648
    %v268 = vxor.u32 %v252, 2147483648
    %v269 = vxor.u32 %v206, 2147483648
    %v270 = vxor.u32 %v208, 2147483648
    %v271 = vxor.u32 %v257, 2147483648
    %v272 = vxor.u32 %v210, 2147483648
    %v273 = vxor.u32 %v212, 2147483648
    %v274 = vxor.u32 %v260, 2147483648
    %v275 = vmul.f32 %v263, 1.442695
    %v276 = vpow.pop %v275
    %v277 = vmul.f32 %v264, 1.442695
    %v278 = vpow.pop %v277
    %v279 = vmul.f32 %v265, 1.442695
    %v280 = vpow.pop %v279
    %v281 = vmul.f32 %v266, 1.442695
    %v282 = vpow.pop %v281
    %v283 = vmul.f32 %v267, 1.442695
    %v284 = vpow.pop %v283
    %v285 = vmul.f32 %v268, 1.442695
    %v286 = vpow.pop %v285
    %v287 = vmul.f32 %v269, 1.442695
    %v288 = vpow.pop %v287
    %v289 = vmul.f32 %v270, 1.442695
    %v290 = vpow.pop %v289
    %v291 = vmul.f32 %v271, 1.442695
    %v292 = vpow.pop %v291
    %v293 = vmul.f32 %v272, 1.442695
    %v294 = vpow.pop %v293
    %v295 = vmul.f32 %v273, 1.442695
    %v296 = vpow.pop %v295
    %v297 = vmul.f32 %v274, 1.442695
    %v298 = vpow.pop %v297
    %v299 = vadd.f32 %v276, 1.0
    %v300 = vadd.f32 %v278, 1.0
    %v301 = vadd.f32 %v280, 1.0
    %v302 = vadd.f32 %v282, 1.0
    %v303 = vadd.f32 %v284, 1.0
    %v304 = vadd.f32 %v286, 1.0
    %v305 = vadd.f32 %v288, 1.0
    %v306 = vadd.f32 %v290, 1.0
    %v307 = vadd.f32 %v292, 1.0
    %v308 = vadd.f32 %v294, 1.0
    %v309 = vadd.f32 %v296, 1.0
    %v310 = vadd.f32 %v298, 1.0
    %v311 = vrcp.pop %v299
    %v312 = vmul.f32 1.0, %v311
    %v313 = vrcp.pop %v300
    %v314 = vmul.f32 1.0, %v313
    %v315 = vrcp.pop %v301
    %v316 = vmul.f32 1.0, %v315
    %v317 = vrcp.pop %v302
    %v318 = vmul.f32 1.0, %v317
    %v319 = vrcp.pop %v303
    %v320 = vmul.f32 1.0, %v319
    %v321 = vrcp.pop %v304
    %v322 = vmul.f32 1.0, %v321
    %v323 = vrcp.pop %v305
    %v324 = vmul.f32 1.0, %v323
    %v325 = vrcp.pop %v306
    %v326 = vmul.f32 1.0, %v325
    %v327 = vrcp.pop %v307
    %v328 = vmul.f32 1.0, %v327
    %v329 = vrcp.pop %v308
    %v330 = vmul.f32 1.0, %v329
    %v331 = vrcp.pop %v309
    %v332 = vmul.f32 1.0, %v331
    %v333 = vrcp.pop %v310
    %v334 = vmul.f32 1.0, %v333
    %v335 = vmul.f32 %v196, %v312
    %v336 = vmul.f32 %v198, %v314
    %v337 = vmul.f32 %v249, %v316
    %v338 = vmul.f32 %v200, %v318
    %v339 = vmul.f32 %v202, %v320
    %v340 = vmul.f32 %v252, %v322
    %v341 = vmul.f32 %v206, %v324
    %v342 = vmul.f32 %v208, %v326
    %v343 = vmul.f32 %v257, %v328
    %v344 = vmul.f32 %v210, %v330
    %v345 = vmul.f32 %v212, %v332
    %v346 = vmul.f32 %v260, %v334
    %v347 = vld [vmem:[%s2] sm:$0x1]
    %v348 = vmul.f32 %v347, 0.03928371
    %v349 = vlaneseq
    %v350 = vshrl.u32 %v349, 7
    %v351 = vsub.s32 0, %v350
    %v352 = vrot.slane %v348, %v351
    %v353 = vmul.f32 %v337, %v352
    %v354 = vmul.f32 %v340, %v352
    %v355 = vmul.f32 %v343, %v352
    %v356 = vmul.f32 %v346, %v352
    %v357 = vld [vmem:[%s2 + $0x1] sm:$0x1]
    %v358 = vmul.f32 %v357, 0.03928371
    %v359 = vlaneseq
    %v360 = vshrl.u32 %v359, 7
    %v361 = vsub.s32 0, %v360
    %v362 = vrot.slane %v358, %v361
    %v363 = vadd.f32 %v353, %v362
    %v364 = vadd.f32 %v354, %v362
    %v365 = vadd.f32 %v355, %v362
    %v366 = vadd.f32 %v356, %v362
    %v367 = vld [vmem:[%s2 + $0x2] sm:$0x1]
    %v368 = vlaneseq
    %v369 = vshrl.u32 %v368, 7
    %v370 = vsub.s32 0, %v369
    %v371 = vrot.slane %v367, %v370
    %v372 = vmul.f32 %v337, %v371
    %v373 = vmul.f32 %v340, %v371
    %v374 = vmul.f32 %v343, %v371
    %v375 = vmul.f32 %v346, %v371
    %v376 = vld [vmem:[%s2 + $0x3] sm:$0x1]
    %v377 = vlaneseq
    %v378 = vshrl.u32 %v377, 7
    %v379 = vsub.s32 0, %v378
    %v380 = vrot.slane %v376, %v379
    %v381 = vadd.f32 %v372, %v380
    %v382 = vadd.f32 %v373, %v380
    %v383 = vadd.f32 %v374, %v380
    %v384 = vadd.f32 %v375, %v380
    %v385 = vpack.c.bf16 %v364, %v363
    %v386 = vpack.c.bf16 %v366, %v365
    %v387 = vpack.c.bf16 %v382, %v381
    %v388 = vpack.c.bf16 %v384, %v383
    %v389 = vlaneseq
    %v390 = vshrl.u32 %v389, 7
    %v391 = vadd.s32 %v390, 8
    %v392 = vlaneseq
    %v393 = vand.u32 %v392, 127
    %vm394 = vcmp.gt.s32.totalorder %v393, %v390
    %vm395 = vcmp.gt.s32.totalorder %v393, %v391
    %396 = vmatprep.subr.bf16.mxu0 0
    %397 = vmatpush1.bf16.xpose.msra.mxu0 %v387
    %398 = vmatprep.subr.bf16.mxu0 0
    %399 = vmatpush1.bf16.xpose.msra.mxu0 0
    %400 = vmatprep.subr.bf16.mxu0 0
    %401 = vmatpush1.bf16.xpose.msra.mxu0 0
    %402 = vmatprep.subr.bf16.mxu0 0
    %403 = vmatpush1.bf16.xpose.msra.mxu0 0
    %404 = vmatprep.subr.bf16.mxu0 0
    %405 = vmatpush1.bf16.xpose.msra.mxu0 0
    %406 = vmatprep.subr.bf16.mxu0 0
    %407 = vmatpush1.bf16.xpose.msra.mxu0 0
    %408 = vmatprep.subr.bf16.mxu0 0
    %409 = vmatpush1.bf16.xpose.msra.mxu0 0
    %410 = vmatprep.subr.bf16.mxu0 0
    %411 = vmatpush1.bf16.xpose.msra.mxu0 0
    %412 = vmatprep.subr.bf16.mxu0 0
    %413 = vmatpush1.bf16.xpose.msra.mxu0 0
    %414 = vmatprep.subr.bf16.mxu0 0
    %415 = vmatpush1.bf16.xpose.msra.mxu0 0
    %416 = vmatprep.subr.bf16.mxu0 0
    %417 = vmatpush1.bf16.xpose.msra.mxu0 0
    %418 = vmatprep.subr.bf16.mxu0 0
    %419 = vmatpush1.bf16.xpose.msra.mxu0 0
    %420 = vmatprep.subr.bf16.mxu0 0
    %421 = vmatpush1.bf16.xpose.msra.mxu0 0
    %422 = vmatprep.subr.bf16.mxu0 0
    %423 = vmatpush1.bf16.xpose.msra.mxu0 0
    %424 = vmatprep.subr.bf16.mxu0 0
    %425 = vmatpush1.bf16.xpose.msra.mxu0 0
    %426 = vmatprep.subr.bf16.mxu0 0
    %427 = vmatpush1.bf16.xpose.msra.mxu0 0
    %428 = vmatprep.mubr.bf16.mxu0 0
    %429 = vmatmul.mubr.bf16.gmra.mrb[0].mxu0 %v385
    %v430 = vpop.f32.mrb[0].mxu0
    %v431 = vadd.f32 0.0, %v430
    %v432 = vpop.f32.mrb[0].mxu0
    %v433 = vpop.f32.mrb[0].mxu0
    %v434 = vadd.f32 0.0, %v433
    %v435 = vpop.f32.mrb[0].mxu0
    %436 = vdwg.mxu0
    %vm437 = vcmask 130048
    %v438 = vsel %vm437, %v431, -inf
    %439 = vmax.xlane.f32.xlu0 %v438
    %v440 = vpop.xlane.xlu0 %439
    %v441 = vsel %vm437, %v434, -inf
    %442 = vmax.xlane.f32.xlu0 %v441
    %v443 = vpop.xlane.xlu0 %442
    %v444 = vsub.f32 %v431, %v440
    %v445 = vsub.f32 %v434, %v443
    %v446 = vmul.f32 %v444, 1.442695
    %v447 = vpow.pop %v446
    %v448 = vmul.f32 %v445, 1.442695
    %v449 = vpow.pop %v448
    %v450 = vsel %vm437, %v447, 0.0
    %451 = vadd.xlane.f32.xlu0 %v450
    %v452 = vpop.xlane.xlu0 %451
    %v453 = vsel %vm437, %v449, 0.0
    %454 = vadd.xlane.f32.xlu0 %v453
    %v455 = vpop.xlane.xlu0 %454
    %v456 = vrcp.pop %v452
    %v457 = vrcp.pop %v455
    %v458 = vmul.f32 %v447, %v456
    %v459 = vmul.f32 %v449, %v457
    %v460 = vsel %vm394, -10000.0, %v458
    %v461 = vsel %vm395, -10000.0, %v459
    %v463 = vsel %vm437, %v460, 0
    %v466 = vsel %vm437, %v461, 0
    %468 = vmatprep.subr.mxu0 0.0
    %469 = vmatpush1.msra.mxu0 %v336
    %470 = vmatprep.subr.mxu0 0.0
    %471 = vmatpush1.msra.mxu0 %v339
    %472 = vmatprep.subr.mxu0 0.0
    %473 = vmatpush1.msra.mxu0 0.0
    %474 = vmatprep.subr.mxu0 0.0
    %475 = vmatpush1.msra.mxu0 0.0
    %476 = vmatprep.subr.mxu0 0.0
    %477 = vmatpush1.msra.mxu0 0.0
    %478 = vmatprep.subr.mxu0 0.0
    %479 = vmatpush1.msra.mxu0 0.0
    %480 = vmatprep.subr.mxu0 0.0
    %481 = vmatpush1.msra.mxu0 0.0
    %482 = vmatprep.subr.mxu0 0.0
    %483 = vmatpush1.msra.mxu0 0.0
    %484 = vmatprep.subr.mxu0 0.0
    %485 = vmatpush1.msra.mxu0 0.0
    %486 = vmatprep.subr.mxu0 0.0
    %487 = vmatpush1.msra.mxu0 0.0
    %488 = vmatprep.subr.mxu0 0.0
    %489 = vmatpush1.msra.mxu0 0.0
    %490 = vmatprep.subr.mxu0 0.0
    %491 = vmatpush1.msra.mxu0 0.0
    %492 = vmatprep.subr.mxu0 0.0
    %493 = vmatpush1.msra.mxu0 0.0
    %494 = vmatprep.subr.mxu0 0.0
    %495 = vmatpush1.msra.mxu0 0.0
    %496 = vmatprep.subr.mxu0 0.0
    %497 = vmatpush1.msra.mxu0 0.0
    %498 = vmatprep.subr.mxu0 0.0
    %499 = vmatpush1.msra.mxu0 0.0
    %500 = vmatprep.subr.mxu0 0.0
    %501 = vmatpush1.msra.mxu0 0.0
    %502 = vmatprep.subr.mxu0 0.0
    %503 = vmatpush1.msra.mxu0 0.0
    %504 = vmatprep.subr.mxu0 0.0
    %505 = vmatpush1.msra.mxu0 0.0
    %506 = vmatprep.subr.mxu0 0.0
    %507 = vmatpush1.msra.mxu0 0.0
    %508 = vmatprep.subr.mxu0 0.0
    %509 = vmatpush1.msra.mxu0 0.0
    %510 = vmatprep.subr.mxu0 0.0
    %511 = vmatpush1.msra.mxu0 0.0
    %512 = vmatprep.subr.mxu0 0.0
    %513 = vmatpush1.msra.mxu0 0.0
    %514 = vmatprep.subr.mxu0 0.0
    %515 = vmatpush1.msra.mxu0 0.0
    %516 = vmatprep.subr.mxu0 0.0
    %517 = vmatpush1.msra.mxu0 0.0
    %518 = vmatprep.subr.mxu0 0.0
    %519 = vmatpush1.msra.mxu0 0.0
    %520 = vmatprep.subr.mxu0 0.0
    %521 = vmatpush1.msra.mxu0 0.0
    %522 = vmatprep.subr.mxu0 0.0
    %523 = vmatpush1.msra.mxu0 0.0
    %524 = vmatprep.subr.mxu0 0.0
    %525 = vmatpush1.msra.mxu0 0.0
    %526 = vmatprep.subr.mxu0 0.0
    %527 = vmatpush1.msra.mxu0 0.0
    %528 = vmatprep.subr.mxu0 0.0
    %529 = vmatpush1.msra.mxu0 0.0
    %530 = vmatprep.subr.mxu0 0.0
    %531 = vmatpush1.msra.mxu0 0.0
    %532 = vmatprep.mubr.f32.mxu0 0.0
    %533 = vmatmul.mubr.f32.gmra.mrb[0].mxu0 %v463
    %v534 = vpop.f32.mrb[0].mxu0
    %v535 = vadd.f32 0.0, %v534
    %v536 = vpop.f32.mrb[0].mxu0
    %537 = vmatprep.mubr.f32.mxu0 0.0
    %538 = vmatmul.mubr.f32.gmra.mrb[0].mxu0 %v466
    %v539 = vpop.f32.mrb[0].mxu0
    %v540 = vadd.f32 0.0, %v539
    %v541 = vpop.f32.mrb[0].mxu0
    %542 = vdwg.mxu0
    %v543 = vmul.f32 %v335, %v535
    %v544 = vmul.f32 %v338, %v540
    %545 = vmatprep.subr.bf16.mxu0 0
    %546 = vmatpush1.bf16.xpose.msra.mxu0 %v388
    %547 = vmatprep.subr.bf16.mxu0 0
    %548 = vmatpush1.bf16.xpose.msra.mxu0 0
    %549 = vmatprep.subr.bf16.mxu0 0
    %550 = vmatpush1.bf16.xpose.msra.mxu0 0
    %551 = vmatprep.subr.bf16.mxu0 0
    %552 = vmatpush1.bf16.xpose.msra.mxu0 0
    %553 = vmatprep.subr.bf16.mxu0 0
    %554 = vmatpush1.bf16.xpose.msra.mxu0 0
    %555 = vmatprep.subr.bf16.mxu0 0
    %556 = vmatpush1.bf16.xpose.msra.mxu0 0
    %557 = vmatprep.subr.bf16.mxu0 0
    %558 = vmatpush1.bf16.xpose.msra.mxu0 0
    %559 = vmatprep.subr.bf16.mxu0 0
    %560 = vmatpush1.bf16.xpose.msra.mxu0 0
    %561 = vmatprep.subr.bf16.mxu0 0
    %562 = vmatpush1.bf16.xpose.msra.mxu0 0
    %563 = vmatprep.subr.bf16.mxu0 0
    %564 = vmatpush1.bf16.xpose.msra.mxu0 0
    %565 = vmatprep.subr.bf16.mxu0 0
    %566 = vmatpush1.bf16.xpose.msra.mxu0 0
    %567 = vmatprep.subr.bf16.mxu0 0
    %568 = vmatpush1.bf16.xpose.msra.mxu0 0
    %569 = vmatprep.subr.bf16.mxu0 0
    %570 = vmatpush1.bf16.xpose.msra.mxu0 0
    %571 = vmatprep.subr.bf16.mxu0 0
    %572 = vmatpush1.bf16.xpose.msra.mxu0 0
    %573 = vmatprep.subr.bf16.mxu0 0
    %574 = vmatpush1.bf16.xpose.msra.mxu0 0
    %575 = vmatprep.subr.bf16.mxu0 0
    %576 = vmatpush1.bf16.xpose.msra.mxu0 0
    %577 = vmatprep.mubr.bf16.mxu0 0
    %578 = vmatmul.mubr.bf16.gmra.mrb[0].mxu0 %v386
    %v579 = vpop.f32.mrb[0].mxu0
    %v580 = vadd.f32 0.0, %v579
    %v581 = vpop.f32.mrb[0].mxu0
    %v582 = vpop.f32.mrb[0].mxu0
    %v583 = vadd.f32 0.0, %v582
    %v584 = vpop.f32.mrb[0].mxu0
    %585 = vdwg.mxu0
    %v586 = vsel %vm437, %v580, -inf
    %587 = vmax.xlane.f32.xlu0 %v586
    %v588 = vpop.xlane.xlu0 %587
    %v589 = vsel %vm437, %v583, -inf
    %590 = vmax.xlane.f32.xlu0 %v589
    %v591 = vpop.xlane.xlu0 %590
    %v592 = vsub.f32 %v580, %v588
    %v593 = vsub.f32 %v583, %v591
    %v594 = vmul.f32 %v592, 1.442695
    %v595 = vpow.pop %v594
    %v596 = vmul.f32 %v593, 1.442695
    %v597 = vpow.pop %v596
    %v598 = vsel %vm437, %v595, 0.0
    %599 = vadd.xlane.f32.xlu0 %v598
    %v600 = vpop.xlane.xlu0 %599
    %v601 = vsel %vm437, %v597, 0.0
    %602 = vadd.xlane.f32.xlu0 %v601
    %v603 = vpop.xlane.xlu0 %602
    %v604 = vrcp.pop %v600
    %v605 = vrcp.pop %v603
    %v606 = vmul.f32 %v595, %v604
    %v607 = vmul.f32 %v597, %v605
    %v608 = vsel %vm394, -10000.0, %v606
    %v609 = vsel %vm395, -10000.0, %v607
    %v611 = vsel %vm437, %v608, 0
    %v614 = vsel %vm437, %v609, 0
    %616 = vmatprep.subr.mxu0 0.0
    %617 = vmatpush1.msra.mxu0 %v342
    %618 = vmatprep.subr.mxu0 0.0
    %619 = vmatpush1.msra.mxu0 %v345
    %620 = vmatprep.subr.mxu0 0.0
    %621 = vmatpush1.msra.mxu0 0.0
    %622 = vmatprep.subr.mxu0 0.0
    %623 = vmatpush1.msra.mxu0 0.0
    %624 = vmatprep.subr.mxu0 0.0
    %625 = vmatpush1.msra.mxu0 0.0
    %626 = vmatprep.subr.mxu0 0.0
    %627 = vmatpush1.msra.mxu0 0.0
    %628 = vmatprep.subr.mxu0 0.0
    %629 = vmatpush1.msra.mxu0 0.0
    %630 = vmatprep.subr.mxu0 0.0
    %631 = vmatpush1.msra.mxu0 0.0
    %632 = vmatprep.subr.mxu0 0.0
    %633 = vmatpush1.msra.mxu0 0.0
    %634 = vmatprep.subr.mxu0 0.0
    %635 = vmatpush1.msra.mxu0 0.0
    %636 = vmatprep.subr.mxu0 0.0
    %637 = vmatpush1.msra.mxu0 0.0
    %638 = vmatprep.subr.mxu0 0.0
    %639 = vmatpush1.msra.mxu0 0.0
    %640 = vmatprep.subr.mxu0 0.0
    %641 = vmatpush1.msra.mxu0 0.0
    %642 = vmatprep.subr.mxu0 0.0
    %643 = vmatpush1.msra.mxu0 0.0
    %644 = vmatprep.subr.mxu0 0.0
    %645 = vmatpush1.msra.mxu0 0.0
    %646 = vmatprep.subr.mxu0 0.0
    %647 = vmatpush1.msra.mxu0 0.0
    %648 = vmatprep.subr.mxu0 0.0
    %649 = vmatpush1.msra.mxu0 0.0
    %650 = vmatprep.subr.mxu0 0.0
    %651 = vmatpush1.msra.mxu0 0.0
    %652 = vmatprep.subr.mxu0 0.0
    %653 = vmatpush1.msra.mxu0 0.0
    %654 = vmatprep.subr.mxu0 0.0
    %655 = vmatpush1.msra.mxu0 0.0
    %656 = vmatprep.subr.mxu0 0.0
    %657 = vmatpush1.msra.mxu0 0.0
    %658 = vmatprep.subr.mxu0 0.0
    %659 = vmatpush1.msra.mxu0 0.0
    %660 = vmatprep.subr.mxu0 0.0
    %661 = vmatpush1.msra.mxu0 0.0
    %662 = vmatprep.subr.mxu0 0.0
    %663 = vmatpush1.msra.mxu0 0.0
    %664 = vmatprep.subr.mxu0 0.0
    %665 = vmatpush1.msra.mxu0 0.0
    %666 = vmatprep.subr.mxu0 0.0
    %667 = vmatpush1.msra.mxu0 0.0
    %668 = vmatprep.subr.mxu0 0.0
    %669 = vmatpush1.msra.mxu0 0.0
    %670 = vmatprep.subr.mxu0 0.0
    %671 = vmatpush1.msra.mxu0 0.0
    %672 = vmatprep.subr.mxu0 0.0
    %673 = vmatpush1.msra.mxu0 0.0
    %674 = vmatprep.subr.mxu0 0.0
    %675 = vmatpush1.msra.mxu0 0.0
    %676 = vmatprep.subr.mxu0 0.0
    %677 = vmatpush1.msra.mxu0 0.0
    %678 = vmatprep.subr.mxu0 0.0
    %679 = vmatpush1.msra.mxu0 0.0
    %680 = vmatprep.mubr.f32.mxu0 0.0
    %681 = vmatmul.mubr.f32.gmra.mrb[0].mxu0 %v611
    %v682 = vpop.f32.mrb[0].mxu0
    %v683 = vadd.f32 0.0, %v682
    %v684 = vpop.f32.mrb[0].mxu0
    %685 = vmatprep.mubr.f32.mxu0 0.0
    %686 = vmatmul.mubr.f32.gmra.mrb[0].mxu0 %v614
    %v687 = vpop.f32.mrb[0].mxu0
    %v688 = vadd.f32 0.0, %v687
    %v689 = vpop.f32.mrb[0].mxu0
    %690 = vdwg.mxu0
    %v691 = vmul.f32 %v341, %v683
    %v692 = vmul.f32 %v344, %v688
    %v693 = vpack.c.bf16 %v544, %v543
    %v694 = vpack.c.bf16 %v692, %v691
    %v695 = vld [vmem:[#allocation7] sm:$0xf]
    %v696 = vld [vmem:[#allocation7 + $0x4] sm:$0xf]
    %v697 = vld [vmem:[#allocation7 + $0x8] sm:$0xf]
    %v698 = vld [vmem:[#allocation7 + $0xc] sm:$0xf]
    %v699 = vld [vmem:[#allocation7 + $0x10] sm:$0xf]
    %v700 = vld [vmem:[#allocation7 + $0x14] sm:$0xf]
    %v701 = vld [vmem:[#allocation7 + $0x18] sm:$0xf]
    %v702 = vld [vmem:[#allocation7 + $0x1c] sm:$0xf]
    %v703 = vld [vmem:[#allocation7 + $0x20] sm:$0xf]
    %v704 = vld [vmem:[#allocation7 + $0x24] sm:$0xf]
    %v705 = vld [vmem:[#allocation7 + $0x28] sm:$0xf]
    %v706 = vld [vmem:[#allocation7 + $0x2c] sm:$0xf]
    %v707 = vld [vmem:[#allocation7 + $0x30] sm:$0xf]
    %v708 = vld [vmem:[#allocation7 + $0x34] sm:$0xf]
    %v709 = vld [vmem:[#allocation7 + $0x38] sm:$0xf]
    %v710 = vld [vmem:[#allocation7 + $0x3c] sm:$0xf]
    %v711 = vld [vmem:[#allocation7 + $0x40] sm:$0xf]
    %v712 = vld [vmem:[#allocation7 + $0x44] sm:$0xf]
    %v713 = vld [vmem:[#allocation7 + $0x48] sm:$0xf]
    %v714 = vld [vmem:[#allocation7 + $0x4c] sm:$0xf]
    %v715 = vld [vmem:[#allocation7 + $0x50] sm:$0xf]
    %v716 = vld [vmem:[#allocation7 + $0x54] sm:$0xf]
    %v717 = vld [vmem:[#allocation7 + $0x58] sm:$0xf]
    %v718 = vld [vmem:[#allocation7 + $0x5c] sm:$0xf]
    %v719 = vld [vmem:[#allocation7 + $0x60] sm:$0xf]
    %v720 = vld [vmem:[#allocation7 + $0x64] sm:$0xf]
    %v721 = vld [vmem:[#allocation7 + $0x68] sm:$0xf]
    %v722 = vld [vmem:[#allocation7 + $0x6c] sm:$0xf]
    %v723 = vld [vmem:[#allocation7 + $0x70] sm:$0xf]
    %v724 = vld [vmem:[#allocation7 + $0x74] sm:$0xf]
    %v725 = vld [vmem:[#allocation7 + $0x78] sm:$0xf]
    %v726 = vld [vmem:[#allocation7 + $0x7c] sm:$0xf]
    %v759 = vunpack.c.l.b16 %v695
    %v760 = vunpack.c.l.b16 %v696
    %v761 = vunpack.c.l.b16 %v697
    %v762 = vunpack.c.l.b16 %v698
    %v763 = vunpack.c.l.b16 %v699
    %v764 = vunpack.c.l.b16 %v700
    %v765 = vunpack.c.l.b16 %v701
    %v766 = vunpack.c.l.b16 %v702
    %v767 = vunpack.c.l.b16 %v703
    %v768 = vunpack.c.l.b16 %v704
    %v769 = vunpack.c.l.b16 %v705
    %v770 = vunpack.c.l.b16 %v706
    %v771 = vunpack.c.l.b16 %v707
    %v772 = vunpack.c.l.b16 %v708
    %v773 = vunpack.c.l.b16 %v709
    %v774 = vunpack.c.l.b16 %v710
    %v775 = vunpack.c.l.b16 %v711
    %v776 = vunpack.c.l.b16 %v712
    %v777 = vunpack.c.l.b16 %v713
    %v778 = vunpack.c.l.b16 %v714
    %v779 = vunpack.c.l.b16 %v715
    %v780 = vunpack.c.l.b16 %v716
    %v781 = vunpack.c.l.b16 %v717
    %v782 = vunpack.c.l.b16 %v718
    %v783 = vunpack.c.l.b16 %v719
    %v784 = vunpack.c.l.b16 %v720
    %v785 = vunpack.c.l.b16 %v721
    %v786 = vunpack.c.l.b16 %v722
    %v787 = vunpack.c.l.b16 %v723
    %v788 = vunpack.c.l.b16 %v724
    %v789 = vunpack.c.l.b16 %v725
    %v790 = vunpack.c.l.b16 %v726
    %v791 = vpack.c.b16 %v760, %v759
    %v792 = vpack.c.b16 %v762, %v761
    %v793 = vpack.c.b16 %v764, %v763
    %v794 = vpack.c.b16 %v766, %v765
    %v795 = vpack.c.b16 %v768, %v767
    %v796 = vpack.c.b16 %v770, %v769
    %v797 = vpack.c.b16 %v772, %v771
    %v798 = vpack.c.b16 %v774, %v773
    %v799 = vpack.c.b16 %v776, %v775
    %v800 = vpack.c.b16 %v778, %v777
    %v801 = vpack.c.b16 %v780, %v779
    %v802 = vpack.c.b16 %v782, %v781
    %v803 = vpack.c.b16 %v784, %v783
    %v804 = vpack.c.b16 %v786, %v785
    %v805 = vpack.c.b16 %v788, %v787
    %v806 = vpack.c.b16 %v790, %v789
    %823 = vmatprep.subr.bf16.mxu0 0
    %824 = vmatpush1.bf16.msra.mxu0 %v791
    %825 = vmatprep.subr.bf16.mxu0 0
    %826 = vmatpush1.bf16.msra.mxu0 %v792
    %827 = vmatprep.subr.bf16.mxu0 0
    %828 = vmatpush1.bf16.msra.mxu0 %v793
    %829 = vmatprep.subr.bf16.mxu0 0
    %830 = vmatpush1.bf16.msra.mxu0 %v794
    %831 = vmatprep.subr.bf16.mxu0 0
    %832 = vmatpush1.bf16.msra.mxu0 %v795
    %833 = vmatprep.subr.bf16.mxu0 0
    %834 = vmatpush1.bf16.msra.mxu0 %v796
    %835 = vmatprep.subr.bf16.mxu0 0
    %836 = vmatpush1.bf16.msra.mxu0 %v797
    %837 = vmatprep.subr.bf16.mxu0 0
    %838 = vmatpush1.bf16.msra.mxu0 %v798
    %839 = vmatprep.subr.bf16.mxu0 0
    %840 = vmatpush1.bf16.msra.mxu0 %v799
    %841 = vmatprep.subr.bf16.mxu0 0
    %842 = vmatpush1.bf16.msra.mxu0 %v800
    %843 = vmatprep.subr.bf16.mxu0 0
    %844 = vmatpush1.bf16.msra.mxu0 %v801
    %845 = vmatprep.subr.bf16.mxu0 0
    %846 = vmatpush1.bf16.msra.mxu0 %v802
    %847 = vmatprep.subr.bf16.mxu0 0
    %848 = vmatpush1.bf16.msra.mxu0 %v803
    %849 = vmatprep.subr.bf16.mxu0 0
    %850 = vmatpush1.bf16.msra.mxu0 %v804
    %851 = vmatprep.subr.bf16.mxu0 0
    %852 = vmatpush1.bf16.msra.mxu0 %v805
    %853 = vmatprep.subr.bf16.mxu0 0
    %854 = vmatpush1.bf16.msra.mxu0 %v806
    %855 = vmatprep.mubr.bf16.mxu0 %v694
    %856 = vmatmul.mubr.bf16.gmra.mrb[0].mxu0 %v693
    %v857 = vpop.f32.mrb[0].mxu0
    %v858 = vadd.f32 0.0, %v857
    %v859 = vpop.f32.mrb[0].mxu0
    %v860 = vpop.f32.mrb[0].mxu0
    %v861 = vadd.f32 0.0, %v860
    %v862 = vpop.f32.mrb[0].mxu0
    %863 = vdwg.mxu0
    %864 = vst [vmem:[#allocation8] sm:$0xff] %v858
    %865 = vst [vmem:[#allocation8 + $0x8] sm:$0xff] %v861
    // Predicated region
    $region30: #{tpu_custom_call.1} parent=1 // pred_check
      _
    $region31: #{tpu_custom_call.1} parent=1 // pred_check_branch
      %867 = sbr.rel (0) target = $region33
    $region32: #{tpu_custom_call.1} parent=1 // pred_region
      %s869 = ssub.s32 256, 256
      %870 = vsyncadd [#allocation4], %s869
      %s871 = sshll.u32 [#allocation8], 4
      %s872 = int_to_ptr.vmem [resolvable:$true] %s871
      %877 = dma.vmem_to_hbm [thread:$0]  %s872, 256, %s4, [#allocation4], 128, 128, 8
    $region33: #{tpu_custom_call.1} parent=1 // pred_fallthru
      _
    // Predicated region
    $region34: #{tpu_custom_call.1} parent=1 // pred_check
      _
    $region35: #{tpu_custom_call.1} parent=1 // pred_check_branch
      %879 = sbr.rel (0) target = $region37
    $region36: #{tpu_custom_call.1} parent=1 // pred_region
      %880 = dma.done [#allocation4], 256
    $region37: #{tpu_custom_call.1} parent=1 // pred_fallthru
      _
    %881 = vsyncpa [#allocation3], 1
    %882 = vsyncpa [#allocation6], 1
    %883 = vsyncpa [#allocation4], 1

</llo_original>
